<compile_context>
chip_gen: v7x
topology: tpu7x:2x2x1
jax: 0.10.0
libtpu: 0.0.40
codegen_flags: <defaults>
</compile_context>

<pallas_src>
import functools

import jax
import jax.numpy as jnp
from jax import lax
from jax.experimental import pallas as pl
from jax.experimental.pallas import tpu as pltpu

# Contract the last dim of both operands: (B, H_in) x (H_out, H_in) -> (B, H_out),
# i.e. x @ W^T without materializing W^T anywhere.
_DN_RHS_T = (((1,), (1,)), ((), ()))


def _decoder_kernel(n_instructions, x_ref, params_ref, out_ref):
    """Whole recurrence in one invocation; writes the (B, I, H) output directly.

    x_ref:      (B, H)       input (batch on sublanes, features on lanes)
    params_ref: (2H + 1, H)  rows [0:H)=W_ih, [H:2H)=W_hh, row 2H = b_ih + b_hh
    out_ref:    (B, I, H)    stacked hidden states
    """
    H = x_ref.shape[1]
    w_ih = params_ref[0:H, :]                 # (H_out, H_in), PyTorch layout
    w_hh = params_ref[H:2 * H, :]             # (H_out, H_in)
    bias = params_ref[2 * H:2 * H + 1, :]     # (1, H)

    # Loop-invariant input projection, computed once.
    xb = lax.dot_general(x_ref[...], w_ih, _DN_RHS_T,
                         preferred_element_type=jnp.float32) + bias

    # Step 0: hx starts at zero, so h0 = relu(xb).  Remaining steps fully unrolled
    # (n_instructions is a static Python int) so the LLO scheduler sees the whole
    # MXU dependency chain.
    h = jnp.maximum(xb, 0.0)
    hs = [h]
    for _ in range(1, n_instructions):
        h = jnp.maximum(
            xb + lax.dot_general(h, w_hh, _DN_RHS_T,
                                 preferred_element_type=jnp.float32),
            0.0)
        hs.append(h)

    # Emit the collected states after the recurrence; out_ref is VMEM-resident
    # (no grid), so HBM still sees a single writeback DMA of the whole buffer.
    for j, hj in enumerate(hs):
        out_ref[:, j, :] = hj.astype(out_ref.dtype)


@functools.partial(jax.jit, static_argnames=("n_instructions",))
def instruction_decoder(x, w_ih, w_hh, b_ih, b_hh, n_instructions):
    """x: (B, H); w_ih/w_hh: (H, H); b_ih/b_hh: (H,). Returns (B, I, H) float32."""
    B, H = x.shape
    I = int(n_instructions)
    # zeros_like(input) as the initial hidden state hard-requires
    # input_size == hidden_size; make that assumption explicit.
    assert w_ih.shape == (H, H) and w_hh.shape == (H, H), (w_ih.shape, w_hh.shape)
    assert b_ih.shape == (H,) and b_hh.shape == (H,), (b_ih.shape, b_hh.shape)

    # Pack all parameters into one slab -> a single HBM->VMEM operand DMA.
    params = jnp.concatenate(
        [jnp.asarray(w_ih, jnp.float32),
         jnp.asarray(w_hh, jnp.float32),
         (jnp.asarray(b_ih, jnp.float32) + jnp.asarray(b_hh, jnp.float32))[None, :]],
        axis=0)                                           # (2H + 1, H)

    vmem = pl.BlockSpec(memory_space=pltpu.MemorySpace.VMEM)
    return pl.pallas_call(
        functools.partial(_decoder_kernel, I),
        out_shape=jax.ShapeDtypeStruct((B, I, H), jnp.float32),
        in_specs=[vmem, vmem],
        out_specs=vmem,
    )(jnp.asarray(x, jnp.float32), params)


def _reference(x, w_ih, w_hh, b_ih, b_hh, n_instructions):
    hx = jnp.zeros_like(x)
    outs = []
    for _ in range(n_instructions):
        hx = jax.nn.relu(x @ w_ih.T + b_ih + hx @ w_hh.T + b_hh)
        outs.append(hx)
    return jnp.stack(outs, axis=1)


if __name__ == "__main__":
    # batch, hidden (== input size, forced by zeros_like(input)), n_instructions
    B, H, I = 4, 32, 6

    key = jax.random.PRNGKey(0)
    kx, k1, k2, k3, k4 = jax.random.split(key, 5)
    scale = 1.0 / jnp.sqrt(H)
    x = jax.random.normal(kx, (B, H), jnp.float32)
    w_ih = jax.random.uniform(k1, (H, H), jnp.float32, -scale, scale)
    w_hh = jax.random.uniform(k2, (H, H), jnp.float32, -scale, scale)
    b_ih = jax.random.uniform(k3, (H,), jnp.float32, -scale, scale)
    b_hh = jax.random.uniform(k4, (H,), jnp.float32, -scale, scale)

    out = instruction_decoder(x, w_ih, w_hh, b_ih, b_hh, I)
    out = jax.block_until_ready(out)

    ref = _reference(x, w_ih, w_hh, b_ih, b_hh, I)
    assert out.shape == (B, I, H), out.shape
    assert jnp.allclose(out, ref, atol=1e-5, rtol=1e-5), \
        float(jnp.max(jnp.abs(out - ref)))

    print("KERNEL_OK")
</pallas_src>

<mosaic_0001>
module attributes {stable_mosaic.version = 11 : i64} {
  func.func @_decoder_kernel(%arg0: memref<4x32xf32, #tpu.memory_space<vmem>>, %arg1: memref<65x32xf32, #tpu.memory_space<vmem>>, %arg2: memref<4x6x32xf32, #tpu.memory_space<vmem>>) attributes {dimension_semantics = [], scalar_prefetch = 0 : i64, scratch_operands = 0 : i64, tpu.core_type = #tpu.core_type<tc>} {
    %c0 = arith.constant 0 : index
    %c0_0 = arith.constant 0 : index
    %0 = vector.load %arg1[%c0, %c0_0] : memref<65x32xf32, #tpu.memory_space<vmem>>, vector<32x32xf32>
    %c32 = arith.constant 32 : index
    %c0_1 = arith.constant 0 : index
    %1 = vector.load %arg1[%c32, %c0_1] : memref<65x32xf32, #tpu.memory_space<vmem>>, vector<32x32xf32>
    %c64 = arith.constant 64 : index
    %c0_2 = arith.constant 0 : index
    %2 = vector.load %arg1[%c64, %c0_2] : memref<65x32xf32, #tpu.memory_space<vmem>>, vector<1x32xf32>
    %c0_3 = arith.constant 0 : index
    %c0_4 = arith.constant 0 : index
    %3 = vector.load %arg0[%c0_3, %c0_4] : memref<4x32xf32, #tpu.memory_space<vmem>>, vector<4x32xf32>
    %cst = arith.constant dense<0.000000e+00> : vector<4x32xf32>
    %4 = tpu.matmul %3, %0, %cst {dimension_numbers = #tpu.dot_dimension_numbers<[1], [1], [0], [0], [0, 0, 1, 0], [], []>} : vector<4x32xf32>, vector<32x32xf32>, vector<4x32xf32> -> vector<4x32xf32>
    %5 = vector.broadcast %2 : vector<1x32xf32> to vector<4x32xf32>
    %6 = arith.addf %4, %5 : vector<4x32xf32>
    %cst_5 = arith.constant 0.000000e+00 : f32
    %7 = vector.broadcast %cst_5 : f32 to vector<4x32xf32>
    %8 = arith.maximumf %6, %7 : vector<4x32xf32>
    %cst_6 = arith.constant dense<0.000000e+00> : vector<4x32xf32>
    %9 = tpu.matmul %8, %1, %cst_6 {dimension_numbers = #tpu.dot_dimension_numbers<[1], [1], [0], [0], [0, 0, 1, 0], [], []>} : vector<4x32xf32>, vector<32x32xf32>, vector<4x32xf32> -> vector<4x32xf32>
    %10 = arith.addf %6, %9 : vector<4x32xf32>
    %cst_7 = arith.constant 0.000000e+00 : f32
    %11 = vector.broadcast %cst_7 : f32 to vector<4x32xf32>
    %12 = arith.maximumf %10, %11 : vector<4x32xf32>
    %cst_8 = arith.constant dense<0.000000e+00> : vector<4x32xf32>
    %13 = tpu.matmul %12, %1, %cst_8 {dimension_numbers = #tpu.dot_dimension_numbers<[1], [1], [0], [0], [0, 0, 1, 0], [], []>} : vector<4x32xf32>, vector<32x32xf32>, vector<4x32xf32> -> vector<4x32xf32>
    %14 = arith.addf %6, %13 : vector<4x32xf32>
    %cst_9 = arith.constant 0.000000e+00 : f32
    %15 = vector.broadcast %cst_9 : f32 to vector<4x32xf32>
    %16 = arith.maximumf %14, %15 : vector<4x32xf32>
    %cst_10 = arith.constant dense<0.000000e+00> : vector<4x32xf32>
    %17 = tpu.matmul %16, %1, %cst_10 {dimension_numbers = #tpu.dot_dimension_numbers<[1], [1], [0], [0], [0, 0, 1, 0], [], []>} : vector<4x32xf32>, vector<32x32xf32>, vector<4x32xf32> -> vector<4x32xf32>
    %18 = arith.addf %6, %17 : vector<4x32xf32>
    %cst_11 = arith.constant 0.000000e+00 : f32
    %19 = vector.broadcast %cst_11 : f32 to vector<4x32xf32>
    %20 = arith.maximumf %18, %19 : vector<4x32xf32>
    %cst_12 = arith.constant dense<0.000000e+00> : vector<4x32xf32>
    %21 = tpu.matmul %20, %1, %cst_12 {dimension_numbers = #tpu.dot_dimension_numbers<[1], [1], [0], [0], [0, 0, 1, 0], [], []>} : vector<4x32xf32>, vector<32x32xf32>, vector<4x32xf32> -> vector<4x32xf32>
    %22 = arith.addf %6, %21 : vector<4x32xf32>
    %cst_13 = arith.constant 0.000000e+00 : f32
    %23 = vector.broadcast %cst_13 : f32 to vector<4x32xf32>
    %24 = arith.maximumf %22, %23 : vector<4x32xf32>
    %cst_14 = arith.constant dense<0.000000e+00> : vector<4x32xf32>
    %25 = tpu.matmul %24, %1, %cst_14 {dimension_numbers = #tpu.dot_dimension_numbers<[1], [1], [0], [0], [0, 0, 1, 0], [], []>} : vector<4x32xf32>, vector<32x32xf32>, vector<4x32xf32> -> vector<4x32xf32>
    %26 = arith.addf %6, %25 : vector<4x32xf32>
    %cst_15 = arith.constant 0.000000e+00 : f32
    %27 = vector.broadcast %cst_15 : f32 to vector<4x32xf32>
    %28 = arith.maximumf %26, %27 : vector<4x32xf32>
    %c0_16 = arith.constant 0 : index
    %c0_17 = arith.constant 0 : index
    %c0_18 = arith.constant 0 : index
    %29 = vector.load %arg2[%c0_16, %c0_17, %c0_18] : memref<4x6x32xf32, #tpu.memory_space<vmem>>, vector<4x1x32xf32>
    %30 = vector.shape_cast %29 : vector<4x1x32xf32> to vector<4x32xf32>
    %31 = vector.shape_cast %8 : vector<4x32xf32> to vector<4x1x32xf32>
    tpu.vector_store %arg2[%c0_16, %c0_17, %c0_18], %31 {strides = array<i32>} : memref<4x6x32xf32, #tpu.memory_space<vmem>>, vector<4x1x32xf32>,
    %c0_19 = arith.constant 0 : index
    %c1 = arith.constant 1 : index
    %c0_20 = arith.constant 0 : index
    %32 = vector.load %arg2[%c0_19, %c1, %c0_20] : memref<4x6x32xf32, #tpu.memory_space<vmem>>, vector<4x1x32xf32>
    %33 = vector.shape_cast %32 : vector<4x1x32xf32> to vector<4x32xf32>
    %34 = vector.shape_cast %12 : vector<4x32xf32> to vector<4x1x32xf32>
    tpu.vector_store %arg2[%c0_19, %c1, %c0_20], %34 {strides = array<i32>} : memref<4x6x32xf32, #tpu.memory_space<vmem>>, vector<4x1x32xf32>,
    %c0_21 = arith.constant 0 : index
    %c2 = arith.constant 2 : index
    %c0_22 = arith.constant 0 : index
    %35 = vector.load %arg2[%c0_21, %c2, %c0_22] : memref<4x6x32xf32, #tpu.memory_space<vmem>>, vector<4x1x32xf32>
    %36 = vector.shape_cast %35 : vector<4x1x32xf32> to vector<4x32xf32>
    %37 = vector.shape_cast %16 : vector<4x32xf32> to vector<4x1x32xf32>
    tpu.vector_store %arg2[%c0_21, %c2, %c0_22], %37 {strides = array<i32>} : memref<4x6x32xf32, #tpu.memory_space<vmem>>, vector<4x1x32xf32>,
    %c0_23 = arith.constant 0 : index
    %c3 = arith.constant 3 : index
    %c0_24 = arith.constant 0 : index
    %38 = vector.load %arg2[%c0_23, %c3, %c0_24] : memref<4x6x32xf32, #tpu.memory_space<vmem>>, vector<4x1x32xf32>
    %39 = vector.shape_cast %38 : vector<4x1x32xf32> to vector<4x32xf32>
    %40 = vector.shape_cast %20 : vector<4x32xf32> to vector<4x1x32xf32>
    tpu.vector_store %arg2[%c0_23, %c3, %c0_24], %40 {strides = array<i32>} : memref<4x6x32xf32, #tpu.memory_space<vmem>>, vector<4x1x32xf32>,
    %c0_25 = arith.constant 0 : index
    %c4 = arith.constant 4 : index
    %c0_26 = arith.constant 0 : index
    %41 = vector.load %arg2[%c0_25, %c4, %c0_26] : memref<4x6x32xf32, #tpu.memory_space<vmem>>, vector<4x1x32xf32>
    %42 = vector.shape_cast %41 : vector<4x1x32xf32> to vector<4x32xf32>
    %43 = vector.shape_cast %24 : vector<4x32xf32> to vector<4x1x32xf32>
    tpu.vector_store %arg2[%c0_25, %c4, %c0_26], %43 {strides = array<i32>} : memref<4x6x32xf32, #tpu.memory_space<vmem>>, vector<4x1x32xf32>,
    %c0_27 = arith.constant 0 : index
    %c5 = arith.constant 5 : index
    %c0_28 = arith.constant 0 : index
    %44 = vector.load %arg2[%c0_27, %c5, %c0_28] : memref<4x6x32xf32, #tpu.memory_space<vmem>>, vector<4x1x32xf32>
    %45 = vector.shape_cast %44 : vector<4x1x32xf32> to vector<4x32xf32>
    %46 = vector.shape_cast %28 : vector<4x32xf32> to vector<4x1x32xf32>
    tpu.vector_store %arg2[%c0_27, %c5, %c0_28], %46 {strides = array<i32>} : memref<4x6x32xf32, #tpu.memory_space<vmem>>, vector<4x1x32xf32>,
    return
  }
}

</mosaic_0001>

<llo_original>
// kernel: instruction_decoder.1
$region0: #{instruction_decoder.1}
  #allocation0 [shape = 'u32[]', space=smem, size = 0x4, offset = 0x4, fixed_abs, tag = 'smem constant byte address 0x4 - core index']
  #allocation1 [shape = 'u32[144,128]{1,0:T(1,128)}', space=vmem, size = 0x12000, scoped, tag = 'internal scratch']
  %s0 = inlined_call_operand.vmem [shape: f32[4,32], index: 0, kind: input, shape index: {}]
  %s1 = inlined_call_operand.vmem [shape: f32[65,32], index: 1, kind: input, shape index: {}]
  %s2 = inlined_call_operand.vmem [shape: f32[4,6,32], index: 2, kind: output, shape index: {}]
  %s3 = sld [smem:[#allocation0]]
  $region18: #{instruction_decoder.1} parent=0
    _
  %s5 = ssub.s32 1, %s3
  %s6 = scalar_select 0, %s5, %s3
  // Predicated region
  $region2: #{instruction_decoder.1} parent=0 // pred_check
    _
  $region3: #{instruction_decoder.1} parent=0 // pred_check_branch
    %8 = sbr.rel (0) target = $region5
  $region4: #{instruction_decoder.1} parent=0 // pred_region
    _
  $region5: #{instruction_decoder.1} parent=0 // pred_fallthru
    _
  // Predicated region
  $region6: #{instruction_decoder.1} parent=0 // pred_check
    _
  $region7: #{instruction_decoder.1} parent=0 // pred_check_branch
    %10 = sbr.rel (0) target = $region9
  $region8: #{instruction_decoder.1} parent=0 // pred_region
    _
  $region9: #{instruction_decoder.1} parent=0 // pred_fallthru
    _
  %v11 = vld [vmem:[%s1] sm:$0xff]
  %v12 = vld [vmem:[%s1 + $0x8] sm:$0xff]
  %v13 = vld [vmem:[%s1 + $0x10] sm:$0xff]
  %v14 = vld [vmem:[%s1 + $0x18] sm:$0xff]
  %v15 = vld [vmem:[%s1 + $0x20] sm:$0xff]
  %v16 = vld [vmem:[%s1 + $0x28] sm:$0xff]
  %v17 = vld [vmem:[%s1 + $0x30] sm:$0xff]
  %v18 = vld [vmem:[%s1 + $0x38] sm:$0xff]
  %v19 = vld [vmem:[%s1 + $0x40] sm:$0x1]
  %v20 = vld [vmem:[%s0] sm:$0xf]
  %v21 = vlaneseq
  %v22 = vshrl.u32 %v21, 7
  %v23 = vsub.s32 0, %v22
  %v24 = vrot.slane %v19, %v23
  %vm25 = vcmask 261120
  %v27 = vsel %vm25, %v20, 0
  %v30 = vsel %vm25, %v11, 0
  %v33 = vsel %vm25, %v12, 0
  %v36 = vsel %vm25, %v13, 0
  %v39 = vsel %vm25, %v14, 0
  %41 = vmatprep.subr.mxu0 0.0
  %42 = vmatpush1.xpose.msra.mxu0 %v30
  %43 = vmatprep.subr.mxu0 0.0
  %44 = vmatpush1.xpose.msra.mxu0 %v33
  %45 = vmatprep.subr.mxu0 0.0
  %46 = vmatpush1.xpose.msra.mxu0 %v36
  %47 = vmatprep.subr.mxu0 0.0
  %48 = vmatpush1.xpose.msra.mxu0 %v39
  %49 = vmatprep.subr.mxu0 0.0
  %50 = vmatpush1.xpose.msra.mxu0 0.0
  %51 = vmatprep.subr.mxu0 0.0
  %52 = vmatpush1.xpose.msra.mxu0 0.0
  %53 = vmatprep.subr.mxu0 0.0
  %54 = vmatpush1.xpose.msra.mxu0 0.0
  %55 = vmatprep.subr.mxu0 0.0
  %56 = vmatpush1.xpose.msra.mxu0 0.0
  %57 = vmatprep.subr.mxu0 0.0
  %58 = vmatpush1.xpose.msra.mxu0 0.0
  %59 = vmatprep.subr.mxu0 0.0
  %60 = vmatpush1.xpose.msra.mxu0 0.0
  %61 = vmatprep.subr.mxu0 0.0
  %62 = vmatpush1.xpose.msra.mxu0 0.0
  %63 = vmatprep.subr.mxu0 0.0
  %64 = vmatpush1.xpose.msra.mxu0 0.0
  %65 = vmatprep.subr.mxu0 0.0
  %66 = vmatpush1.xpose.msra.mxu0 0.0
  %67 = vmatprep.subr.mxu0 0.0
  %68 = vmatpush1.xpose.msra.mxu0 0.0
  %69 = vmatprep.subr.mxu0 0.0
  %70 = vmatpush1.xpose.msra.mxu0 0.0
  %71 = vmatprep.subr.mxu0 0.0
  %72 = vmatpush1.xpose.msra.mxu0 0.0
  %73 = vmatprep.subr.mxu0 0.0
  %74 = vmatpush1.xpose.msra.mxu0 0.0
  %75 = vmatprep.subr.mxu0 0.0
  %76 = vmatpush1.xpose.msra.mxu0 0.0
  %77 = vmatprep.subr.mxu0 0.0
  %78 = vmatpush1.xpose.msra.mxu0 0.0
  %79 = vmatprep.subr.mxu0 0.0
  %80 = vmatpush1.xpose.msra.mxu0 0.0
  %81 = vmatprep.subr.mxu0 0.0
  %82 = vmatpush1.xpose.msra.mxu0 0.0
  %83 = vmatprep.subr.mxu0 0.0
  %84 = vmatpush1.xpose.msra.mxu0 0.0
  %85 = vmatprep.subr.mxu0 0.0
  %86 = vmatpush1.xpose.msra.mxu0 0.0
  %87 = vmatprep.subr.mxu0 0.0
  %88 = vmatpush1.xpose.msra.mxu0 0.0
  %89 = vmatprep.subr.mxu0 0.0
  %90 = vmatpush1.xpose.msra.mxu0 0.0
  %91 = vmatprep.subr.mxu0 0.0
  %92 = vmatpush1.xpose.msra.mxu0 0.0
  %93 = vmatprep.subr.mxu0 0.0
  %94 = vmatpush1.xpose.msra.mxu0 0.0
  %95 = vmatprep.subr.mxu0 0.0
  %96 = vmatpush1.xpose.msra.mxu0 0.0
  %97 = vmatprep.subr.mxu0 0.0
  %98 = vmatpush1.xpose.msra.mxu0 0.0
  %99 = vmatprep.subr.mxu0 0.0
  %100 = vmatpush1.xpose.msra.mxu0 0.0
  %101 = vmatprep.subr.mxu0 0.0
  %102 = vmatpush1.xpose.msra.mxu0 0.0
  %103 = vmatprep.subr.mxu0 0.0
  %104 = vmatpush1.xpose.msra.mxu0 0.0
  %105 = vmatprep.mubr.f32.mxu0 0.0
  %106 = vmatmul.mubr.f32.gmra.mrb[0].mxu0 %v27
  %v107 = vpop.f32.mrb[0].mxu0
  %v108 = vadd.f32 %v24, %v107
  %v109 = vpop.f32.mrb[0].mxu0
  %110 = vdwg.mxu0
  %v111 = vmax.f32 %v108, 0.0
  %v113 = vsel %vm25, %v111, 0
  %v116 = vsel %vm25, %v15, 0
  %v119 = vsel %vm25, %v16, 0
  %v122 = vsel %vm25, %v17, 0
  %v125 = vsel %vm25, %v18, 0
  %127 = vmatprep.subr.mxu0 0.0
  %128 = vmatpush1.xpose.msra.mxu0 %v116
  %129 = vmatprep.subr.mxu0 0.0
  %130 = vmatpush1.xpose.msra.mxu0 %v119
  %131 = vmatprep.subr.mxu0 0.0
  %132 = vmatpush1.xpose.msra.mxu0 %v122
  %133 = vmatprep.subr.mxu0 0.0
  %134 = vmatpush1.xpose.msra.mxu0 %v125
  %135 = vmatprep.subr.mxu0 0.0
  %136 = vmatpush1.xpose.msra.mxu0 0.0
  %137 = vmatprep.subr.mxu0 0.0
  %138 = vmatpush1.xpose.msra.mxu0 0.0
  %139 = vmatprep.subr.mxu0 0.0
  %140 = vmatpush1.xpose.msra.mxu0 0.0
  %141 = vmatprep.subr.mxu0 0.0
  %142 = vmatpush1.xpose.msra.mxu0 0.0
  %143 = vmatprep.subr.mxu0 0.0
  %144 = vmatpush1.xpose.msra.mxu0 0.0
  %145 = vmatprep.subr.mxu0 0.0
  %146 = vmatpush1.xpose.msra.mxu0 0.0
  %147 = vmatprep.subr.mxu0 0.0
  %148 = vmatpush1.xpose.msra.mxu0 0.0
  %149 = vmatprep.subr.mxu0 0.0
  %150 = vmatpush1.xpose.msra.mxu0 0.0
  %151 = vmatprep.subr.mxu0 0.0
  %152 = vmatpush1.xpose.msra.mxu0 0.0
  %153 = vmatprep.subr.mxu0 0.0
  %154 = vmatpush1.xpose.msra.mxu0 0.0
  %155 = vmatprep.subr.mxu0 0.0
  %156 = vmatpush1.xpose.msra.mxu0 0.0
  %157 = vmatprep.subr.mxu0 0.0
  %158 = vmatpush1.xpose.msra.mxu0 0.0
  %159 = vmatprep.subr.mxu0 0.0
  %160 = vmatpush1.xpose.msra.mxu0 0.0
  %161 = vmatprep.subr.mxu0 0.0
  %162 = vmatpush1.xpose.msra.mxu0 0.0
  %163 = vmatprep.subr.mxu0 0.0
  %164 = vmatpush1.xpose.msra.mxu0 0.0
  %165 = vmatprep.subr.mxu0 0.0
  %166 = vmatpush1.xpose.msra.mxu0 0.0
  %167 = vmatprep.subr.mxu0 0.0
  %168 = vmatpush1.xpose.msra.mxu0 0.0
  %169 = vmatprep.subr.mxu0 0.0
  %170 = vmatpush1.xpose.msra.mxu0 0.0
  %171 = vmatprep.subr.mxu0 0.0
  %172 = vmatpush1.xpose.msra.mxu0 0.0
  %173 = vmatprep.subr.mxu0 0.0
  %174 = vmatpush1.xpose.msra.mxu0 0.0
  %175 = vmatprep.subr.mxu0 0.0
  %176 = vmatpush1.xpose.msra.mxu0 0.0
  %177 = vmatprep.subr.mxu0 0.0
  %178 = vmatpush1.xpose.msra.mxu0 0.0
  %179 = vmatprep.subr.mxu0 0.0
  %180 = vmatpush1.xpose.msra.mxu0 0.0
  %181 = vmatprep.subr.mxu0 0.0
  %182 = vmatpush1.xpose.msra.mxu0 0.0
  %183 = vmatprep.subr.mxu0 0.0
  %184 = vmatpush1.xpose.msra.mxu0 0.0
  %185 = vmatprep.subr.mxu0 0.0
  %186 = vmatpush1.xpose.msra.mxu0 0.0
  %187 = vmatprep.subr.mxu0 0.0
  %188 = vmatpush1.xpose.msra.mxu0 0.0
  %189 = vmatprep.subr.mxu0 0.0
  %190 = vmatpush1.xpose.msra.mxu0 0.0
  %191 = vmatprep.mubr.f32.mxu0 0.0
  %192 = vmatmul.mubr.f32.gmra.mrb[0].mxu0 %v113
  %v193 = vpop.f32.mrb[0].mxu0
  %v194 = vadd.f32 0.0, %v193
  %v195 = vpop.f32.mrb[0].mxu0
  %196 = vdwg.mxu0
  %v197 = vadd.f32 %v108, %v194
  %v198 = vmax.f32 %v197, 0.0
  %v200 = vsel %vm25, %v198, 0
  %202 = vmatprep.subr.mxu0 0.0
  %203 = vmatpush1.xpose.msra.mxu0 %v116
  %204 = vmatprep.subr.mxu0 0.0
  %205 = vmatpush1.xpose.msra.mxu0 %v119
  %206 = vmatprep.subr.mxu0 0.0
  %207 = vmatpush1.xpose.msra.mxu0 %v122
  %208 = vmatprep.subr.mxu0 0.0
  %209 = vmatpush1.xpose.msra.mxu0 %v125
  %210 = vmatprep.subr.mxu0 0.0
  %211 = vmatpush1.xpose.msra.mxu0 0.0
  %212 = vmatprep.subr.mxu0 0.0
  %213 = vmatpush1.xpose.msra.mxu0 0.0
  %214 = vmatprep.subr.mxu0 0.0
  %215 = vmatpush1.xpose.msra.mxu0 0.0
  %216 = vmatprep.subr.mxu0 0.0
  %217 = vmatpush1.xpose.msra.mxu0 0.0
  %218 = vmatprep.subr.mxu0 0.0
  %219 = vmatpush1.xpose.msra.mxu0 0.0
  %220 = vmatprep.subr.mxu0 0.0
  %221 = vmatpush1.xpose.msra.mxu0 0.0
  %222 = vmatprep.subr.mxu0 0.0
  %223 = vmatpush1.xpose.msra.mxu0 0.0
  %224 = vmatprep.subr.mxu0 0.0
  %225 = vmatpush1.xpose.msra.mxu0 0.0
  %226 = vmatprep.subr.mxu0 0.0
  %227 = vmatpush1.xpose.msra.mxu0 0.0
  %228 = vmatprep.subr.mxu0 0.0
  %229 = vmatpush1.xpose.msra.mxu0 0.0
  %230 = vmatprep.subr.mxu0 0.0
  %231 = vmatpush1.xpose.msra.mxu0 0.0
  %232 = vmatprep.subr.mxu0 0.0
  %233 = vmatpush1.xpose.msra.mxu0 0.0
  %234 = vmatprep.subr.mxu0 0.0
  %235 = vmatpush1.xpose.msra.mxu0 0.0
  %236 = vmatprep.subr.mxu0 0.0
  %237 = vmatpush1.xpose.msra.mxu0 0.0
  %238 = vmatprep.subr.mxu0 0.0
  %239 = vmatpush1.xpose.msra.mxu0 0.0
  %240 = vmatprep.subr.mxu0 0.0
  %241 = vmatpush1.xpose.msra.mxu0 0.0
  %242 = vmatprep.subr.mxu0 0.0
  %243 = vmatpush1.xpose.msra.mxu0 0.0
  %244 = vmatprep.subr.mxu0 0.0
  %245 = vmatpush1.xpose.msra.mxu0 0.0
  %246 = vmatprep.subr.mxu0 0.0
  %247 = vmatpush1.xpose.msra.mxu0 0.0
  %248 = vmatprep.subr.mxu0 0.0
  %249 = vmatpush1.xpose.msra.mxu0 0.0
  %250 = vmatprep.subr.mxu0 0.0
  %251 = vmatpush1.xpose.msra.mxu0 0.0
  %252 = vmatprep.subr.mxu0 0.0
  %253 = vmatpush1.xpose.msra.mxu0 0.0
  %254 = vmatprep.subr.mxu0 0.0
  %255 = vmatpush1.xpose.msra.mxu0 0.0
  %256 = vmatprep.subr.mxu0 0.0
  %257 = vmatpush1.xpose.msra.mxu0 0.0
  %258 = vmatprep.subr.mxu0 0.0
  %259 = vmatpush1.xpose.msra.mxu0 0.0
  %260 = vmatprep.subr.mxu0 0.0
  %261 = vmatpush1.xpose.msra.mxu0 0.0
  %262 = vmatprep.subr.mxu0 0.0
  %263 = vmatpush1.xpose.msra.mxu0 0.0
  %264 = vmatprep.subr.mxu0 0.0
  %265 = vmatpush1.xpose.msra.mxu0 0.0
  %266 = vmatprep.mubr.f32.mxu0 0.0
  %267 = vmatmul.mubr.f32.gmra.mrb[0].mxu0 %v200
  %v268 = vpop.f32.mrb[0].mxu0
  %v269 = vadd.f32 0.0, %v268
  %v270 = vpop.f32.mrb[0].mxu0
  %271 = vdwg.mxu0
  %v272 = vadd.f32 %v108, %v269
  %v273 = vmax.f32 %v272, 0.0
  %v275 = vsel %vm25, %v273, 0
  %277 = vmatprep.subr.mxu0 0.0
  %278 = vmatpush1.xpose.msra.mxu0 %v116
  %279 = vmatprep.subr.mxu0 0.0
  %280 = vmatpush1.xpose.msra.mxu0 %v119
  %281 = vmatprep.subr.mxu0 0.0
  %282 = vmatpush1.xpose.msra.mxu0 %v122
  %283 = vmatprep.subr.mxu0 0.0
  %284 = vmatpush1.xpose.msra.mxu0 %v125
  %285 = vmatprep.subr.mxu0 0.0
  %286 = vmatpush1.xpose.msra.mxu0 0.0
  %287 = vmatprep.subr.mxu0 0.0
  %288 = vmatpush1.xpose.msra.mxu0 0.0
  %289 = vmatprep.subr.mxu0 0.0
  %290 = vmatpush1.xpose.msra.mxu0 0.0
  %291 = vmatprep.subr.mxu0 0.0
  %292 = vmatpush1.xpose.msra.mxu0 0.0
  %293 = vmatprep.subr.mxu0 0.0
  %294 = vmatpush1.xpose.msra.mxu0 0.0
  %295 = vmatprep.subr.mxu0 0.0
  %296 = vmatpush1.xpose.msra.mxu0 0.0
  %297 = vmatprep.subr.mxu0 0.0
  %298 = vmatpush1.xpose.msra.mxu0 0.0
  %299 = vmatprep.subr.mxu0 0.0
  %300 = vmatpush1.xpose.msra.mxu0 0.0
  %301 = vmatprep.subr.mxu0 0.0
  %302 = vmatpush1.xpose.msra.mxu0 0.0
  %303 = vmatprep.subr.mxu0 0.0
  %304 = vmatpush1.xpose.msra.mxu0 0.0
  %305 = vmatprep.subr.mxu0 0.0
  %306 = vmatpush1.xpose.msra.mxu0 0.0
  %307 = vmatprep.subr.mxu0 0.0
  %308 = vmatpush1.xpose.msra.mxu0 0.0
  %309 = vmatprep.subr.mxu0 0.0
  %310 = vmatpush1.xpose.msra.mxu0 0.0
  %311 = vmatprep.subr.mxu0 0.0
  %312 = vmatpush1.xpose.msra.mxu0 0.0
  %313 = vmatprep.subr.mxu0 0.0
  %314 = vmatpush1.xpose.msra.mxu0 0.0
  %315 = vmatprep.subr.mxu0 0.0
  %316 = vmatpush1.xpose.msra.mxu0 0.0
  %317 = vmatprep.subr.mxu0 0.0
  %318 = vmatpush1.xpose.msra.mxu0 0.0
  %319 = vmatprep.subr.mxu0 0.0
  %320 = vmatpush1.xpose.msra.mxu0 0.0
  %321 = vmatprep.subr.mxu0 0.0
  %322 = vmatpush1.xpose.msra.mxu0 0.0
  %323 = vmatprep.subr.mxu0 0.0
  %324 = vmatpush1.xpose.msra.mxu0 0.0
  %325 = vmatprep.subr.mxu0 0.0
  %326 = vmatpush1.xpose.msra.mxu0 0.0
  %327 = vmatprep.subr.mxu0 0.0
  %328 = vmatpush1.xpose.msra.mxu0 0.0
  %329 = vmatprep.subr.mxu0 0.0
  %330 = vmatpush1.xpose.msra.mxu0 0.0
  %331 = vmatprep.subr.mxu0 0.0
  %332 = vmatpush1.xpose.msra.mxu0 0.0
  %333 = vmatprep.subr.mxu0 0.0
  %334 = vmatpush1.xpose.msra.mxu0 0.0
  %335 = vmatprep.subr.mxu0 0.0
  %336 = vmatpush1.xpose.msra.mxu0 0.0
  %337 = vmatprep.subr.mxu0 0.0
  %338 = vmatpush1.xpose.msra.mxu0 0.0
  %339 = vmatprep.subr.mxu0 0.0
  %340 = vmatpush1.xpose.msra.mxu0 0.0
  %341 = vmatprep.mubr.f32.mxu0 0.0
  %342 = vmatmul.mubr.f32.gmra.mrb[0].mxu0 %v275
  %v343 = vpop.f32.mrb[0].mxu0
  %v344 = vadd.f32 0.0, %v343
  %v345 = vpop.f32.mrb[0].mxu0
  %346 = vdwg.mxu0
  %v347 = vadd.f32 %v108, %v344
  %v348 = vmax.f32 %v347, 0.0
  %v350 = vsel %vm25, %v348, 0
  %352 = vmatprep.subr.mxu0 0.0
  %353 = vmatpush1.xpose.msra.mxu0 %v116
  %354 = vmatprep.subr.mxu0 0.0
  %355 = vmatpush1.xpose.msra.mxu0 %v119
  %356 = vmatprep.subr.mxu0 0.0
  %357 = vmatpush1.xpose.msra.mxu0 %v122
  %358 = vmatprep.subr.mxu0 0.0
  %359 = vmatpush1.xpose.msra.mxu0 %v125
  %360 = vmatprep.subr.mxu0 0.0
  %361 = vmatpush1.xpose.msra.mxu0 0.0
  %362 = vmatprep.subr.mxu0 0.0
  %363 = vmatpush1.xpose.msra.mxu0 0.0
  %364 = vmatprep.subr.mxu0 0.0
  %365 = vmatpush1.xpose.msra.mxu0 0.0
  %366 = vmatprep.subr.mxu0 0.0
  %367 = vmatpush1.xpose.msra.mxu0 0.0
  %368 = vmatprep.subr.mxu0 0.0
  %369 = vmatpush1.xpose.msra.mxu0 0.0
  %370 = vmatprep.subr.mxu0 0.0
  %371 = vmatpush1.xpose.msra.mxu0 0.0
  %372 = vmatprep.subr.mxu0 0.0
  %373 = vmatpush1.xpose.msra.mxu0 0.0
  %374 = vmatprep.subr.mxu0 0.0
  %375 = vmatpush1.xpose.msra.mxu0 0.0
  %376 = vmatprep.subr.mxu0 0.0
  %377 = vmatpush1.xpose.msra.mxu0 0.0
  %378 = vmatprep.subr.mxu0 0.0
  %379 = vmatpush1.xpose.msra.mxu0 0.0
  %380 = vmatprep.subr.mxu0 0.0
  %381 = vmatpush1.xpose.msra.mxu0 0.0
  %382 = vmatprep.subr.mxu0 0.0
  %383 = vmatpush1.xpose.msra.mxu0 0.0
  %384 = vmatprep.subr.mxu0 0.0
  %385 = vmatpush1.xpose.msra.mxu0 0.0
  %386 = vmatprep.subr.mxu0 0.0
  %387 = vmatpush1.xpose.msra.mxu0 0.0
  %388 = vmatprep.subr.mxu0 0.0
  %389 = vmatpush1.xpose.msra.mxu0 0.0
  %390 = vmatprep.subr.mxu0 0.0
  %391 = vmatpush1.xpose.msra.mxu0 0.0
  %392 = vmatprep.subr.mxu0 0.0
  %393 = vmatpush1.xpose.msra.mxu0 0.0
  %394 = vmatprep.subr.mxu0 0.0
  %395 = vmatpush1.xpose.msra.mxu0 0.0
  %396 = vmatprep.subr.mxu0 0.0
  %397 = vmatpush1.xpose.msra.mxu0 0.0
  %398 = vmatprep.subr.mxu0 0.0
  %399 = vmatpush1.xpose.msra.mxu0 0.0
  %400 = vmatprep.subr.mxu0 0.0
  %401 = vmatpush1.xpose.msra.mxu0 0.0
  %402 = vmatprep.subr.mxu0 0.0
  %403 = vmatpush1.xpose.msra.mxu0 0.0
  %404 = vmatprep.subr.mxu0 0.0
  %405 = vmatpush1.xpose.msra.mxu0 0.0
  %406 = vmatprep.subr.mxu0 0.0
  %407 = vmatpush1.xpose.msra.mxu0 0.0
  %408 = vmatprep.subr.mxu0 0.0
  %409 = vmatpush1.xpose.msra.mxu0 0.0
  %410 = vmatprep.subr.mxu0 0.0
  %411 = vmatpush1.xpose.msra.mxu0 0.0
  %412 = vmatprep.subr.mxu0 0.0
  %413 = vmatpush1.xpose.msra.mxu0 0.0
  %414 = vmatprep.subr.mxu0 0.0
  %415 = vmatpush1.xpose.msra.mxu0 0.0
  %416 = vmatprep.mubr.f32.mxu0 0.0
  %417 = vmatmul.mubr.f32.gmra.mrb[0].mxu0 %v350
  %v418 = vpop.f32.mrb[0].mxu0
  %v419 = vadd.f32 0.0, %v418
  %v420 = vpop.f32.mrb[0].mxu0
  %421 = vdwg.mxu0
  %v422 = vadd.f32 %v108, %v419
  %v423 = vmax.f32 %v422, 0.0
  %v425 = vsel %vm25, %v423, 0
  %427 = vmatprep.subr.mxu0 0.0
  %428 = vmatpush1.xpose.msra.mxu0 %v116
  %429 = vmatprep.subr.mxu0 0.0
  %430 = vmatpush1.xpose.msra.mxu0 %v119
  %431 = vmatprep.subr.mxu0 0.0
  %432 = vmatpush1.xpose.msra.mxu0 %v122
  %433 = vmatprep.subr.mxu0 0.0
  %434 = vmatpush1.xpose.msra.mxu0 %v125
  %435 = vmatprep.subr.mxu0 0.0
  %436 = vmatpush1.xpose.msra.mxu0 0.0
  %437 = vmatprep.subr.mxu0 0.0
  %438 = vmatpush1.xpose.msra.mxu0 0.0
  %439 = vmatprep.subr.mxu0 0.0
  %440 = vmatpush1.xpose.msra.mxu0 0.0
  %441 = vmatprep.subr.mxu0 0.0
  %442 = vmatpush1.xpose.msra.mxu0 0.0
  %443 = vmatprep.subr.mxu0 0.0
  %444 = vmatpush1.xpose.msra.mxu0 0.0
  %445 = vmatprep.subr.mxu0 0.0
  %446 = vmatpush1.xpose.msra.mxu0 0.0
  %447 = vmatprep.subr.mxu0 0.0
  %448 = vmatpush1.xpose.msra.mxu0 0.0
  %449 = vmatprep.subr.mxu0 0.0
  %450 = vmatpush1.xpose.msra.mxu0 0.0
  %451 = vmatprep.subr.mxu0 0.0
  %452 = vmatpush1.xpose.msra.mxu0 0.0
  %453 = vmatprep.subr.mxu0 0.0
  %454 = vmatpush1.xpose.msra.mxu0 0.0
  %455 = vmatprep.subr.mxu0 0.0
  %456 = vmatpush1.xpose.msra.mxu0 0.0
  %457 = vmatprep.subr.mxu0 0.0
  %458 = vmatpush1.xpose.msra.mxu0 0.0
  %459 = vmatprep.subr.mxu0 0.0
  %460 = vmatpush1.xpose.msra.mxu0 0.0
  %461 = vmatprep.subr.mxu0 0.0
  %462 = vmatpush1.xpose.msra.mxu0 0.0
  %463 = vmatprep.subr.mxu0 0.0
  %464 = vmatpush1.xpose.msra.mxu0 0.0
  %465 = vmatprep.subr.mxu0 0.0
  %466 = vmatpush1.xpose.msra.mxu0 0.0
  %467 = vmatprep.subr.mxu0 0.0
  %468 = vmatpush1.xpose.msra.mxu0 0.0
  %469 = vmatprep.subr.mxu0 0.0
  %470 = vmatpush1.xpose.msra.mxu0 0.0
  %471 = vmatprep.subr.mxu0 0.0
  %472 = vmatpush1.xpose.msra.mxu0 0.0
  %473 = vmatprep.subr.mxu0 0.0
  %474 = vmatpush1.xpose.msra.mxu0 0.0
  %475 = vmatprep.subr.mxu0 0.0
  %476 = vmatpush1.xpose.msra.mxu0 0.0
  %477 = vmatprep.subr.mxu0 0.0
  %478 = vmatpush1.xpose.msra.mxu0 0.0
  %479 = vmatprep.subr.mxu0 0.0
  %480 = vmatpush1.xpose.msra.mxu0 0.0
  %481 = vmatprep.subr.mxu0 0.0
  %482 = vmatpush1.xpose.msra.mxu0 0.0
  %483 = vmatprep.subr.mxu0 0.0
  %484 = vmatpush1.xpose.msra.mxu0 0.0
  %485 = vmatprep.subr.mxu0 0.0
  %486 = vmatpush1.xpose.msra.mxu0 0.0
  %487 = vmatprep.subr.mxu0 0.0
  %488 = vmatpush1.xpose.msra.mxu0 0.0
  %489 = vmatprep.subr.mxu0 0.0
  %490 = vmatpush1.xpose.msra.mxu0 0.0
  %491 = vmatprep.mubr.f32.mxu0 0.0
  %492 = vmatmul.mubr.f32.gmra.mrb[0].mxu0 %v425
  %v493 = vpop.f32.mrb[0].mxu0
  %v494 = vadd.f32 0.0, %v493
  %v495 = vpop.f32.mrb[0].mxu0
  %496 = vdwg.mxu0
  %v497 = vadd.f32 %v108, %v494
  %v498 = vmax.f32 %v497, 0.0
  %v500 = vunpack.c.l.s4 1966171168
  %v501 = vunpack.c.0.s8 %v500
  %v502 = vlaneseq
  %v503 = vshrl.u32 %v502, 7
  %v504 = vsub.s32 %v501, %v503
  %v505 = vrot.slane %v111, %v504
  %v506 = vcombine.high %v505, %v505
  %v508 = vunpack.c.l.s4 1966171168
  %v509 = vunpack.c.0.s8 %v508
  %v510 = vlaneseq
  %v511 = vshrl.u32 %v510, 7
  %v512 = vsub.s32 %v509, %v511
  %v513 = vrot.slane %v505, %v512
  %v515 = vunpack.c.l.s4 1966171168
  %v516 = vunpack.c.0.s8 %v515
  %v517 = vlaneseq
  %v518 = vshrl.u32 %v517, 7
  %v519 = vsub.s32 %v516, %v518
  %v520 = vrot.slane %v506, %v519
  %v521 = vcombine.high %v513, %v513
  %v522 = vcombine.high %v520, %v520
  %vm527 = vcmask 253952
  %528 = vst.msk [vmem:[%s2] sm:$0x1] %vm527, %v513
  %529 = vst.msk [vmem:[%s2 + $0x8] sm:$0x1] %vm527, %v520
  %530 = vst.msk [vmem:[%s2 + $0x10] sm:$0x1] %vm527, %v521
  %531 = vst.msk [vmem:[%s2 + $0x18] sm:$0x1] %vm527, %v522
  %v533 = vunpack.c.l.s4 1966171168
  %v534 = vunpack.c.0.s8 %v533
  %v535 = vlaneseq
  %v536 = vshrl.u32 %v535, 7
  %v537 = vsub.s32 %v534, %v536
  %v538 = vrot.slane %v198, %v537
  %v539 = vcombine.high %v538, %v538
  %v541 = vunpack.c.l.s4 1966171168
  %v542 = vunpack.c.0.s8 %v541
  %v543 = vlaneseq
  %v544 = vshrl.u32 %v543, 7
  %v545 = vsub.s32 %v542, %v544
  %v546 = vrot.slane %v538, %v545
  %v548 = vunpack.c.l.s4 1966171168
  %v549 = vunpack.c.0.s8 %v548
  %v550 = vlaneseq
  %v551 = vshrl.u32 %v550, 7
  %v552 = vsub.s32 %v549, %v551
  %v553 = vrot.slane %v539, %v552
  %v554 = vcombine.high %v546, %v546
  %v555 = vcombine.high %v553, %v553
  %560 = vst.msk [vmem:[%s2 + $0x1] sm:$0x1] %vm527, %v546
  %561 = vst.msk [vmem:[%s2 + $0x9] sm:$0x1] %vm527, %v553
  %562 = vst.msk [vmem:[%s2 + $0x11] sm:$0x1] %vm527, %v554
  %563 = vst.msk [vmem:[%s2 + $0x19] sm:$0x1] %vm527, %v555
  %v565 = vunpack.c.l.s4 1966171168
  %v566 = vunpack.c.0.s8 %v565
  %v567 = vlaneseq
  %v568 = vshrl.u32 %v567, 7
  %v569 = vsub.s32 %v566, %v568
  %v570 = vrot.slane %v273, %v569
  %v571 = vcombine.high %v570, %v570
  %v573 = vunpack.c.l.s4 1966171168
  %v574 = vunpack.c.0.s8 %v573
  %v575 = vlaneseq
  %v576 = vshrl.u32 %v575, 7
  %v577 = vsub.s32 %v574, %v576
  %v578 = vrot.slane %v570, %v577
  %v580 = vunpack.c.l.s4 1966171168
  %v581 = vunpack.c.0.s8 %v580
  %v582 = vlaneseq
  %v583 = vshrl.u32 %v582, 7
  %v584 = vsub.s32 %v581, %v583
  %v585 = vrot.slane %v571, %v584
  %v586 = vcombine.high %v578, %v578
  %v587 = vcombine.high %v585, %v585
  %592 = vst.msk [vmem:[%s2 + $0x2] sm:$0x1] %vm527, %v578
  %593 = vst.msk [vmem:[%s2 + $0xa] sm:$0x1] %vm527, %v585
  %594 = vst.msk [vmem:[%s2 + $0x12] sm:$0x1] %vm527, %v586
  %595 = vst.msk [vmem:[%s2 + $0x1a] sm:$0x1] %vm527, %v587
  %v597 = vunpack.c.l.s4 1966171168
  %v598 = vunpack.c.0.s8 %v597
  %v599 = vlaneseq
  %v600 = vshrl.u32 %v599, 7
  %v601 = vsub.s32 %v598, %v600
  %v602 = vrot.slane %v348, %v601
  %v603 = vcombine.high %v602, %v602
  %v605 = vunpack.c.l.s4 1966171168
  %v606 = vunpack.c.0.s8 %v605
  %v607 = vlaneseq
  %v608 = vshrl.u32 %v607, 7
  %v609 = vsub.s32 %v606, %v608
  %v610 = vrot.slane %v602, %v609
  %v612 = vunpack.c.l.s4 1966171168
  %v613 = vunpack.c.0.s8 %v612
  %v614 = vlaneseq
  %v615 = vshrl.u32 %v614, 7
  %v616 = vsub.s32 %v613, %v615
  %v617 = vrot.slane %v603, %v616
  %v618 = vcombine.high %v610, %v610
  %v619 = vcombine.high %v617, %v617
  %624 = vst.msk [vmem:[%s2 + $0x3] sm:$0x1] %vm527, %v610
  %625 = vst.msk [vmem:[%s2 + $0xb] sm:$0x1] %vm527, %v617
  %626 = vst.msk [vmem:[%s2 + $0x13] sm:$0x1] %vm527, %v618
  %627 = vst.msk [vmem:[%s2 + $0x1b] sm:$0x1] %vm527, %v619
  %v629 = vunpack.c.l.s4 1966171168
  %v630 = vunpack.c.0.s8 %v629
  %v631 = vlaneseq
  %v632 = vshrl.u32 %v631, 7
  %v633 = vsub.s32 %v630, %v632
  %v634 = vrot.slane %v423, %v633
  %v635 = vcombine.high %v634, %v634
  %v637 = vunpack.c.l.s4 1966171168
  %v638 = vunpack.c.0.s8 %v637
  %v639 = vlaneseq
  %v640 = vshrl.u32 %v639, 7
  %v641 = vsub.s32 %v638, %v640
  %v642 = vrot.slane %v634, %v641
  %v644 = vunpack.c.l.s4 1966171168
  %v645 = vunpack.c.0.s8 %v644
  %v646 = vlaneseq
  %v647 = vshrl.u32 %v646, 7
  %v648 = vsub.s32 %v645, %v647
  %v649 = vrot.slane %v635, %v648
  %v650 = vcombine.high %v642, %v642
  %v651 = vcombine.high %v649, %v649
  %656 = vst.msk [vmem:[%s2 + $0x4] sm:$0x1] %vm527, %v642
  %657 = vst.msk [vmem:[%s2 + $0xc] sm:$0x1] %vm527, %v649
  %658 = vst.msk [vmem:[%s2 + $0x14] sm:$0x1] %vm527, %v650
  %659 = vst.msk [vmem:[%s2 + $0x1c] sm:$0x1] %vm527, %v651
  %v662 = vunpack.c.l.s4 1966171168
  %v663 = vunpack.c.0.s8 %v662
  %v664 = vlaneseq
  %v665 = vshrl.u32 %v664, 7
  %v666 = vsub.s32 %v663, %v665
  %v667 = vrot.slane %v498, %v666
  %v668 = vcombine.high %v667, %v667
  %v670 = vunpack.c.l.s4 1966171168
  %v671 = vunpack.c.0.s8 %v670
  %v672 = vlaneseq
  %v673 = vshrl.u32 %v672, 7
  %v674 = vsub.s32 %v671, %v673
  %v675 = vrot.slane %v667, %v674
  %v677 = vunpack.c.l.s4 1966171168
  %v678 = vunpack.c.0.s8 %v677
  %v679 = vlaneseq
  %v680 = vshrl.u32 %v679, 7
  %v681 = vsub.s32 %v678, %v680
  %v682 = vrot.slane %v668, %v681
  %v683 = vcombine.high %v675, %v675
  %v684 = vcombine.high %v682, %v682
  %689 = vst.msk [vmem:[%s2 + $0x5] sm:$0x1] %vm527, %v675
  %690 = vst.msk [vmem:[%s2 + $0xd] sm:$0x1] %vm527, %v682
  %691 = vst.msk [vmem:[%s2 + $0x15] sm:$0x1] %vm527, %v683
  %692 = vst.msk [vmem:[%s2 + $0x1d] sm:$0x1] %vm527, %v684
  // Predicated region
  $region10: #{instruction_decoder.1} parent=0 // pred_check
    _
  $region11: #{instruction_decoder.1} parent=0 // pred_check_branch
    %694 = sbr.rel (0) target = $region13
  $region12: #{instruction_decoder.1} parent=0 // pred_region
    _
  $region13: #{instruction_decoder.1} parent=0 // pred_fallthru
    _
  // Predicated region
  $region14: #{instruction_decoder.1} parent=0 // pred_check
    _
  $region15: #{instruction_decoder.1} parent=0 // pred_check_branch
    %696 = sbr.rel (0) target = $region17
  $region16: #{instruction_decoder.1} parent=0 // pred_region
    _
  $region17: #{instruction_decoder.1} parent=0 // pred_fallthru
    _

</llo_original>
